<compile_context>
chip_gen: v6e
topology: v6e:2x2x1
jax: 0.10.0
libtpu: 0.0.40
codegen_flags: <defaults>
</compile_context>

<pallas_src>
import functools

import jax
import jax.numpy as jnp
from jax.experimental import pallas as pl
from jax.experimental.pallas import tpu as pltpu


def _make_dense_kernel(H, W, Cin, Cout, mxu_dtype):
    HW = H * W

    def kernel(x_ref, w_ref, b_ref, out_ref):
        # x_ref  : (1, Cin, H*W)       one batch element, channels on sublanes, H*W on lanes
        # w_ref  : (Cout, 9*Cin)       conv weights, row index = (kh*3 + kw)*Cin + c
        # b_ref  : (Cout, 1)           conv bias (f32)
        # out_ref: (1, Cin+Cout, H*W)  concat(x, relu(conv(x))) along channels
        x = x_ref[0]                              # (Cin, HW), original dtype
        xc = x.astype(mxu_dtype)

        # Flat pixel index / column index, used to zero the elements that wrap around the
        # image border when rolling over the flattened H*W axis.
        flat = jax.lax.broadcasted_iota(jnp.int32, (Cin, HW), 1)
        col = flat % W

        # Build the (9*Cin, HW) im2col matrix with XLU rolls + VPU masks.
        pieces = []
        for dy in (-1, 0, 1):
            for dx in (-1, 0, 1):
                s = dy * W + dx                   # source flat index = flat + s
                if s == 0:
                    shifted = xc
                else:
                    shifted = pltpu.roll(xc, shift=(-s) % HW, axis=1)
                conds = []
                if dy == -1:
                    conds.append(flat >= W)               # needs source row h-1 >= 0
                elif dy == 1:
                    conds.append(flat < (H - 1) * W)      # needs source row h+1 <= H-1
                if dx == -1:
                    conds.append(col >= 1)                # needs source col w-1 >= 0
                elif dx == 1:
                    conds.append(col <= W - 2)            # needs source col w+1 <= W-1
                if conds:
                    mask = functools.reduce(jnp.logical_and, conds)
                    shifted = jnp.where(mask, shifted, jnp.zeros_like(shifted))
                pieces.append(shifted)
        patches = jnp.concatenate(pieces, axis=0)         # (9*Cin, HW)

        # Single fused MXU matmul: (Cout, 9*Cin) @ (9*Cin, HW) -> (Cout, HW), f32 accum.
        acc = jnp.dot(w_ref[...], patches, preferred_element_type=jnp.float32)
        acc = acc + b_ref[...]                            # (Cout, 1) lane-broadcast
        y = jnp.maximum(acc, 0.0)

        # Write concat(x, relu(conv(x))) directly in NCHW; lane dimension is fully dense.
        out_ref[0, 0:Cin, :] = x.astype(out_ref.dtype)
        out_ref[0, Cin:Cin + Cout, :] = y.astype(out_ref.dtype)

    return kernel


def make_dense_forward(x_nchw, w_oihw, b, *, mxu_dtype=jnp.float32):
    """Equivalent of MakeDense.forward: (N, Cin, H, W) -> (N, Cin+Cout, H, W)."""
    N, Cin, H, W = x_nchw.shape
    Cout = w_oihw.shape[0]
    HW = H * W

    # Channels stay on the sublane axis; flatten H*W onto the minor (lane) axis.
    # (Pure reshape -- no transpose, no padded HBM copy of x.)
    x_flat = x_nchw.reshape(N, Cin, HW)

    # OIHW -> (Cout, 9*Cin) with row index (kh*3 + kw)*Cin + c, matching the kernel's
    # im2col stacking order.  Optionally pre-cast to bf16 for the MXU.
    w_mat = jnp.transpose(w_oihw, (0, 2, 3, 1)).reshape(Cout, 9 * Cin).astype(mxu_dtype)
    b2 = b.reshape(Cout, 1).astype(jnp.float32)

    out_flat = pl.pallas_call(
        _make_dense_kernel(H, W, Cin, Cout, mxu_dtype),
        out_shape=jax.ShapeDtypeStruct((N, Cin + Cout, HW), x_nchw.dtype),
        grid=(N,),
        in_specs=[
            pl.BlockSpec((1, Cin, HW), lambda n: (n, 0, 0)),
            pl.BlockSpec((Cout, 9 * Cin), lambda n: (0, 0)),
            pl.BlockSpec((Cout, 1), lambda n: (0, 0)),
        ],
        out_specs=pl.BlockSpec((1, Cin + Cout, HW), lambda n: (n, 0, 0)),
        compiler_params=pltpu.CompilerParams(
            dimension_semantics=("parallel",)),
    )(x_flat, w_mat, b2)

    # Trailing-dim split only -> metadata-level reshape back to (N, Cin+Cout, H, W).
    return out_flat.reshape(N, Cin + Cout, H, W)


def _reference(x_nchw, w_oihw, b):
    """Pure-JAX reference (lax conv) for correctness checking."""
    y = jax.lax.conv_general_dilated(
        x_nchw, w_oihw, window_strides=(1, 1), padding=((1, 1), (1, 1)),
        dimension_numbers=("NCHW", "OIHW", "NCHW"))
    y = jax.nn.relu(y + b.reshape(1, -1, 1, 1))
    return jnp.concatenate([x_nchw, y], axis=1)


if __name__ == "__main__":
    # Small, deterministic example: N=2, Cin=4, Cout=8, H=W=16.
    N, Cin, Cout, H, W = 2, 4, 8, 16, 16

    key = jax.random.PRNGKey(0)
    kx, kw, kb = jax.random.split(key, 3)
    x = jax.random.normal(kx, (N, Cin, H, W), dtype=jnp.float32)
    # Deterministic synthetic Conv2d parameters (shapes from nn.Conv2d(Cin, Cout, 3)).
    w = 0.1 * jax.random.normal(kw, (Cout, Cin, 3, 3), dtype=jnp.float32)
    b = 0.1 * jax.random.normal(kb, (Cout,), dtype=jnp.float32)

    ref = _reference(x, w, b)

    # Full-precision MXU path.
    out = jax.block_until_ready(make_dense_forward(x, w, b))
    assert out.shape == (N, Cin + Cout, H, W), out.shape
    assert jnp.allclose(out, ref, atol=1e-4, rtol=1e-4), float(
        jnp.max(jnp.abs(out - ref)))

    # bf16 MXU path (recommended on v5e/v6e); pass-through x stays exact, conv in bf16.
    out_bf16 = jax.block_until_ready(
        make_dense_forward(x, w, b, mxu_dtype=jnp.bfloat16))
    assert jnp.allclose(out_bf16, ref, atol=5e-2, rtol=5e-2), float(
        jnp.max(jnp.abs(out_bf16 - ref)))

    print("KERNEL_OK")
</pallas_src>

<mosaic_0001>
module attributes {stable_mosaic.version = 11 : i64} {
  func.func @kernel(%arg0: i32, %arg1: memref<1x4x256xf32, #tpu.memory_space<vmem>>, %arg2: memref<8x36xf32, #tpu.memory_space<vmem>>, %arg3: memref<8x1xf32, #tpu.memory_space<vmem>>, %arg4: memref<1x12x256xf32, #tpu.memory_space<vmem>>) attributes {dimension_semantics = [#tpu.dimension_semantics<parallel>], iteration_bounds = array<i64: 2>, scalar_prefetch = 0 : i64, scratch_operands = 0 : i64, tpu.core_type = #tpu.core_type<tc>, window_params = [{transform_indices = @transform_0, window_bounds = array<i64: 1, 4, 256>}, {pipeline_mode = #tpu.pipeline_mode<synchronous>, transform_indices = @transform_1, window_bounds = array<i64: 8, 36>}, {pipeline_mode = #tpu.pipeline_mode<synchronous>, transform_indices = @transform_2, window_bounds = array<i64: 8, 1>}, {transform_indices = @transform_3, window_bounds = array<i64: 1, 12, 256>}]} {
    %c0 = arith.constant 0 : index
    %c0_0 = arith.constant 0 : index
    %c0_1 = arith.constant 0 : index
    %0 = vector.load %arg1[%c0, %c0_0, %c0_1] : memref<1x4x256xf32, #tpu.memory_space<vmem>>, vector<1x4x256xf32>
    %1 = vector.shape_cast %0 : vector<1x4x256xf32> to vector<4x256xf32>
    %2 = tpu.iota {dimensions = array<i32: 1>} : vector<4x256xi32>
    %c16_i32 = arith.constant 16 : i32
    %c0_i32 = arith.constant 0 : i32
    %3 = arith.cmpi eq, %c16_i32, %c0_i32 : i32
    %c1_i32 = arith.constant 1 : i32
    %4 = arith.select %3, %c1_i32, %c16_i32 : i32
    %5 = vector.broadcast %4 : i32 to vector<4x256xi32>
    %6 = arith.remsi %2, %5 : vector<4x256xi32>
    %c0_i32_2 = arith.constant 0 : i32
    %7 = vector.broadcast %c0_i32_2 : i32 to vector<4x256xi32>
    %8 = arith.cmpi ne, %6, %7 : vector<4x256xi32>
    %c0_i32_3 = arith.constant 0 : i32
    %9 = vector.broadcast %c0_i32_3 : i32 to vector<4x256xi32>
    %10 = arith.cmpi slt, %6, %9 : vector<4x256xi32>
    %c0_i32_4 = arith.constant 0 : i32
    %11 = arith.cmpi slt, %4, %c0_i32_4 : i32
    %12 = vector.broadcast %11 : i1 to vector<4x256xi1>
    %13 = vector.broadcast %12 : vector<4x256xi1> to vector<4x256xi1>
    %14 = arith.xori %10, %13 : vector<4x256xi1>
    %15 = arith.andi %14, %8 : vector<4x256xi1>
    %16 = vector.broadcast %4 : i32 to vector<4x256xi32>
    %17 = arith.addi %6, %16 : vector<4x256xi32>
    %18 = arith.select %15, %17, %6 : vector<4x256xi1>, vector<4x256xi32>
    %c17_i32 = arith.constant 17 : i32
    %19 = tpu.dynamic_rotate %1 by %c17_i32 dim 1 : vector<4x256xf32>, i32 -> vector<4x256xf32>
    %c16_i32_5 = arith.constant 16 : i32
    %20 = vector.broadcast %c16_i32_5 : i32 to vector<4x256xi32>
    %21 = arith.cmpi sge, %2, %20 : vector<4x256xi32>
    %c1_i32_6 = arith.constant 1 : i32
    %22 = vector.broadcast %c1_i32_6 : i32 to vector<4x256xi32>
    %23 = arith.cmpi sge, %18, %22 : vector<4x256xi32>
    %24 = arith.andi %21, %23 : vector<4x256xi1>
    %cst = arith.constant 0.000000e+00 : f32
    %25 = vector.broadcast %cst : f32 to vector<4x256xf32>
    %26 = arith.select %24, %19, %25 : vector<4x256xi1>, vector<4x256xf32>
    %c16_i32_7 = arith.constant 16 : i32
    %27 = tpu.dynamic_rotate %1 by %c16_i32_7 dim 1 : vector<4x256xf32>, i32 -> vector<4x256xf32>
    %c16_i32_8 = arith.constant 16 : i32
    %28 = vector.broadcast %c16_i32_8 : i32 to vector<4x256xi32>
    %29 = arith.cmpi sge, %2, %28 : vector<4x256xi32>
    %cst_9 = arith.constant 0.000000e+00 : f32
    %30 = vector.broadcast %cst_9 : f32 to vector<4x256xf32>
    %31 = arith.select %29, %27, %30 : vector<4x256xi1>, vector<4x256xf32>
    %c15_i32 = arith.constant 15 : i32
    %32 = tpu.dynamic_rotate %1 by %c15_i32 dim 1 : vector<4x256xf32>, i32 -> vector<4x256xf32>
    %c16_i32_10 = arith.constant 16 : i32
    %33 = vector.broadcast %c16_i32_10 : i32 to vector<4x256xi32>
    %34 = arith.cmpi sge, %2, %33 : vector<4x256xi32>
    %c14_i32 = arith.constant 14 : i32
    %35 = vector.broadcast %c14_i32 : i32 to vector<4x256xi32>
    %36 = arith.cmpi sle, %18, %35 : vector<4x256xi32>
    %37 = arith.andi %34, %36 : vector<4x256xi1>
    %cst_11 = arith.constant 0.000000e+00 : f32
    %38 = vector.broadcast %cst_11 : f32 to vector<4x256xf32>
    %39 = arith.select %37, %32, %38 : vector<4x256xi1>, vector<4x256xf32>
    %c1_i32_12 = arith.constant 1 : i32
    %40 = tpu.dynamic_rotate %1 by %c1_i32_12 dim 1 : vector<4x256xf32>, i32 -> vector<4x256xf32>
    %c1_i32_13 = arith.constant 1 : i32
    %41 = vector.broadcast %c1_i32_13 : i32 to vector<4x256xi32>
    %42 = arith.cmpi sge, %18, %41 : vector<4x256xi32>
    %cst_14 = arith.constant 0.000000e+00 : f32
    %43 = vector.broadcast %cst_14 : f32 to vector<4x256xf32>
    %44 = arith.select %42, %40, %43 : vector<4x256xi1>, vector<4x256xf32>
    %c255_i32 = arith.constant 255 : i32
    %45 = tpu.dynamic_rotate %1 by %c255_i32 dim 1 : vector<4x256xf32>, i32 -> vector<4x256xf32>
    %c14_i32_15 = arith.constant 14 : i32
    %46 = vector.broadcast %c14_i32_15 : i32 to vector<4x256xi32>
    %47 = arith.cmpi sle, %18, %46 : vector<4x256xi32>
    %cst_16 = arith.constant 0.000000e+00 : f32
    %48 = vector.broadcast %cst_16 : f32 to vector<4x256xf32>
    %49 = arith.select %47, %45, %48 : vector<4x256xi1>, vector<4x256xf32>
    %c241_i32 = arith.constant 241 : i32
    %50 = tpu.dynamic_rotate %1 by %c241_i32 dim 1 : vector<4x256xf32>, i32 -> vector<4x256xf32>
    %c240_i32 = arith.constant 240 : i32
    %51 = vector.broadcast %c240_i32 : i32 to vector<4x256xi32>
    %52 = arith.cmpi slt, %2, %51 : vector<4x256xi32>
    %c1_i32_17 = arith.constant 1 : i32
    %53 = vector.broadcast %c1_i32_17 : i32 to vector<4x256xi32>
    %54 = arith.cmpi sge, %18, %53 : vector<4x256xi32>
    %55 = arith.andi %52, %54 : vector<4x256xi1>
    %cst_18 = arith.constant 0.000000e+00 : f32
    %56 = vector.broadcast %cst_18 : f32 to vector<4x256xf32>
    %57 = arith.select %55, %50, %56 : vector<4x256xi1>, vector<4x256xf32>
    %c240_i32_19 = arith.constant 240 : i32
    %58 = tpu.dynamic_rotate %1 by %c240_i32_19 dim 1 : vector<4x256xf32>, i32 -> vector<4x256xf32>
    %c240_i32_20 = arith.constant 240 : i32
    %59 = vector.broadcast %c240_i32_20 : i32 to vector<4x256xi32>
    %60 = arith.cmpi slt, %2, %59 : vector<4x256xi32>
    %cst_21 = arith.constant 0.000000e+00 : f32
    %61 = vector.broadcast %cst_21 : f32 to vector<4x256xf32>
    %62 = arith.select %60, %58, %61 : vector<4x256xi1>, vector<4x256xf32>
    %c239_i32 = arith.constant 239 : i32
    %63 = tpu.dynamic_rotate %1 by %c239_i32 dim 1 : vector<4x256xf32>, i32 -> vector<4x256xf32>
    %c240_i32_22 = arith.constant 240 : i32
    %64 = vector.broadcast %c240_i32_22 : i32 to vector<4x256xi32>
    %65 = arith.cmpi slt, %2, %64 : vector<4x256xi32>
    %c14_i32_23 = arith.constant 14 : i32
    %66 = vector.broadcast %c14_i32_23 : i32 to vector<4x256xi32>
    %67 = arith.cmpi sle, %18, %66 : vector<4x256xi32>
    %68 = arith.andi %65, %67 : vector<4x256xi1>
    %cst_24 = arith.constant 0.000000e+00 : f32
    %69 = vector.broadcast %cst_24 : f32 to vector<4x256xf32>
    %70 = arith.select %68, %63, %69 : vector<4x256xi1>, vector<4x256xf32>
    %71 = tpu.concatenate %26, %31, %39, %44, %1, %49, %57, %62, %70 in 0 : vector<4x256xf32>, vector<4x256xf32>, vector<4x256xf32>, vector<4x256xf32>, vector<4x256xf32>, vector<4x256xf32>, vector<4x256xf32>, vector<4x256xf32>, vector<4x256xf32> -> vector<36x256xf32>
    %c0_25 = arith.constant 0 : index
    %c0_26 = arith.constant 0 : index
    %72 = vector.load %arg2[%c0_25, %c0_26] : memref<8x36xf32, #tpu.memory_space<vmem>>, vector<8x36xf32>
    %cst_27 = arith.constant dense<0.000000e+00> : vector<8x256xf32>
    %73 = tpu.matmul %72, %71, %cst_27 {dimension_numbers = #tpu.dot_dimension_numbers<[1], [0], [0], [1], [0, 0, 1, 1], [], []>} : vector<8x36xf32>, vector<36x256xf32>, vector<8x256xf32> -> vector<8x256xf32>
    %c0_28 = arith.constant 0 : index
    %c0_29 = arith.constant 0 : index
    %74 = vector.load %arg3[%c0_28, %c0_29] : memref<8x1xf32, #tpu.memory_space<vmem>>, vector<8x1xf32>
    %75 = vector.broadcast %74 : vector<8x1xf32> to vector<8x256xf32>
    %76 = arith.addf %73, %75 : vector<8x256xf32>
    %cst_30 = arith.constant 0.000000e+00 : f32
    %77 = vector.broadcast %cst_30 : f32 to vector<8x256xf32>
    %78 = arith.maximumf %76, %77 : vector<8x256xf32>
    %c0_31 = arith.constant 0 : index
    %c0_32 = arith.constant 0 : index
    %c0_33 = arith.constant 0 : index
    %79 = vector.load %arg4[%c0_31, %c0_32, %c0_33] : memref<1x12x256xf32, #tpu.memory_space<vmem>>, vector<1x4x256xf32>
    %80 = vector.shape_cast %79 : vector<1x4x256xf32> to vector<4x256xf32>
    %81 = vector.shape_cast %1 : vector<4x256xf32> to vector<1x4x256xf32>
    tpu.vector_store %arg4[%c0_31, %c0_32, %c0_33], %81 {strides = array<i32>} : memref<1x12x256xf32, #tpu.memory_space<vmem>>, vector<1x4x256xf32>,
    %c0_34 = arith.constant 0 : index
    %c4 = arith.constant 4 : index
    %c0_35 = arith.constant 0 : index
    %82 = vector.load %arg4[%c0_34, %c4, %c0_35] : memref<1x12x256xf32, #tpu.memory_space<vmem>>, vector<1x8x256xf32>
    %83 = vector.shape_cast %82 : vector<1x8x256xf32> to vector<8x256xf32>
    %84 = vector.shape_cast %78 : vector<8x256xf32> to vector<1x8x256xf32>
    tpu.vector_store %arg4[%c0_34, %c4, %c0_35], %84 {strides = array<i32>} : memref<1x12x256xf32, #tpu.memory_space<vmem>>, vector<1x8x256xf32>,
    return
  }
  func.func @transform_0(%arg0: i32) -> (i32, i32, i32) {
    %c0_i32 = arith.constant 0 : i32
    %c0_i32_0 = arith.constant 0 : i32
    %c0_i32_1 = arith.constant 0 : i32
    return %arg0, %c0_i32, %c0_i32_0 : i32, i32, i32
  }
  func.func @transform_1(%arg0: i32) -> (i32, i32) {
    %c0_i32 = arith.constant 0 : i32
    %c0_i32_0 = arith.constant 0 : i32
    %c0_i32_1 = arith.constant 0 : i32
    return %c0_i32, %c0_i32_0 : i32, i32
  }
  func.func @transform_2(%arg0: i32) -> (i32, i32) {
    %c0_i32 = arith.constant 0 : i32
    %c0_i32_0 = arith.constant 0 : i32
    %c0_i32_1 = arith.constant 0 : i32
    return %c0_i32, %c0_i32_0 : i32, i32
  }
  func.func @transform_3(%arg0: i32) -> (i32, i32, i32) {
    %c0_i32 = arith.constant 0 : i32
    %c0_i32_0 = arith.constant 0 : i32
    %c0_i32_1 = arith.constant 0 : i32
    return %arg0, %c0_i32, %c0_i32_0 : i32, i32, i32
  }
}

</mosaic_0001>

<llo_original>
// kernel: tpu_custom_call.1
$region0: #{tpu_custom_call.1}
  #allocation0 [shape = 'u32[]', space=smem, size = 0x4, offset = 0x4, fixed_abs, tag = 'smem constant byte address 0x4 - core index']
  #allocation1 [shape = 'u32[144,128]{1,0:T(1,128)}', space=vmem, size = 0x12000, scoped, tag = 'internal scratch']
  %s0 = inlined_call_operand.hbm [shape: f32[2,4,256], index: 0, kind: input, shape index: {}]
  %s1 = inlined_call_operand.vmem [shape: f32[8,36], index: 1, kind: input, shape index: {}]
  %s2 = inlined_call_operand.vmem [shape: f32[8,1], index: 2, kind: input, shape index: {}]
  %s3 = inlined_call_operand.vmem [shape: f32[2,12,256], index: 3, kind: output, shape index: {}]
  %s4 = sld [smem:[#allocation0]]
  $region49: #{tpu_custom_call.1} parent=0
    _
  %s6 = ssub.s32 1, %s4
  %s7 = scalar_select 0, %s6, %s4
  $region1: #{tpu_custom_call.1} parent=0
    #allocation2 [shape = 'u8[8192]{0}', space=vmem, size = 0x2000, scoped, tag = 'input window, operand 0']
    #allocation3 [shape = 's32[2]{0}', space=sflag, size = 0x8, scoped, tag = 'scoped memory for tpu_custom_call.1']
    %8 = vsyncpa [#allocation3], 0
    %s9 = scalar_lea.sflag [#allocation3], 1
    %10 = vsyncpa %s9, 0
    loop: start=0, step=1, limit=4
    $region2: #{tpu_custom_call.1} parent=1 // loop_pre_header
      _
    $region3: #{tpu_custom_call.1} parent=1 // loop_header
      %s12 = sphi 0, %s16
      %p13 = scmp.ge.s32.totalorder %s12, 4
      %s22 = sphi 0, %s24
      %s25 = sphi 0, %s22
      %s26 = sphi 0, %s25
      %s42 = sphi 0, %s26
      %s46 = sphi 0, %s46
      %s48 = sphi 0, %s46
      %s49 = sphi 0, %s48
      %s63 = sphi 0, %s49
      %s67 = sphi 0, %s67
      %s69 = sphi 0, %s67
      %s70 = sphi 0, %s69
      %s84 = sphi 0, %s70
      %s90 = sphi 0, %s92
      %s93 = sphi 0, %s90
      %s94 = sphi 0, %s93
      %s110 = sphi 0, %s94
    $region4: #{tpu_custom_call.1} parent=1 // loop_header_branch
      %15 = sbr.rel (%p13) target = $region8
    $region5: #{tpu_custom_call.1} parent=1 // loop_body
      %s17 = ssub.s32 %s12, 1
      %s18 = ssub.s32 %s12, 2
      %s19 = sadd.s32 %s12, 1
      %s20 = ssub.s32 %s12, %s19
      %p21 = scmp.eq.s32.totalorder %s20, 0
      %s23 = sadd.s32 %s22, 1
      %s24 = scalar_select %p21, %s22, %s23
      %p27 = pneg %p21
      %p28 = scmp.eq.s32.totalorder %s12, 1
      %p29 = por %p27, %p28
      %p30 = scmp.ne.s32.totalorder %s22, %s25
      %p31 = scmp.eq.s32.totalorder %s12, 0
      %p32 = por %p30, %p31
      %p33 = scmp.ne.s32.totalorder %s22, %s25
      %p34 = scmp.eq.s32.totalorder %s17, 1
      %p35 = por %p33, %p34
      %p36 = scmp.ne.s32.totalorder %s25, %s26
      %p37 = scmp.eq.s32.totalorder %s17, 0
      %p38 = por %p36, %p37
      %p39 = scmp.ne.s32.totalorder %s25, %s26
      %p40 = scmp.eq.s32.totalorder %s18, 1
      %p41 = por %p39, %p40
      %p43 = scmp.ne.s32.totalorder %s26, %s42
      %p44 = scmp.eq.s32.totalorder %s18, 0
      %p45 = por %p43, %p44
      %s47 = sadd.s32 %s46, 1
      %p50 = scmp.eq.s32.totalorder %s12, 1
      %p51 = scmp.ne.s32.totalorder %s46, %s48
      %p52 = scmp.eq.s32.totalorder %s12, 0
      %p53 = por %p51, %p52
      %p54 = scmp.ne.s32.totalorder %s46, %s48
      %p55 = scmp.eq.s32.totalorder %s17, 1
      %p56 = por %p54, %p55
      %p57 = scmp.ne.s32.totalorder %s48, %s49
      %p58 = scmp.eq.s32.totalorder %s17, 0
      %p59 = por %p57, %p58
      %p60 = scmp.ne.s32.totalorder %s48, %s49
      %p61 = scmp.eq.s32.totalorder %s18, 1
      %p62 = por %p60, %p61
      %p64 = scmp.ne.s32.totalorder %s49, %s63
      %p65 = scmp.eq.s32.totalorder %s18, 0
      %p66 = por %p64, %p65
      %s68 = sadd.s32 %s67, 1
      %p71 = scmp.eq.s32.totalorder %s12, 1
      %p72 = scmp.ne.s32.totalorder %s67, %s69
      %p73 = scmp.eq.s32.totalorder %s12, 0
      %p74 = por %p72, %p73
      %p75 = scmp.ne.s32.totalorder %s67, %s69
      %p76 = scmp.eq.s32.totalorder %s17, 1
      %p77 = por %p75, %p76
      %p78 = scmp.ne.s32.totalorder %s69, %s70
      %p79 = scmp.eq.s32.totalorder %s17, 0
      %p80 = por %p78, %p79
      %p81 = scmp.ne.s32.totalorder %s69, %s70
      %p82 = scmp.eq.s32.totalorder %s18, 1
      %p83 = por %p81, %p82
      %p85 = scmp.ne.s32.totalorder %s70, %s84
      %p86 = scmp.eq.s32.totalorder %s18, 0
      %p87 = por %p85, %p86
      %s88 = ssub.s32 %s12, %s19
      %p89 = scmp.eq.s32.totalorder %s88, 0
      %s91 = sadd.s32 %s90, 1
      %s92 = scalar_select %p89, %s90, %s91
      %p95 = pneg %p89
      %p96 = scmp.eq.s32.totalorder %s12, 1
      %p97 = por %p95, %p96
      %p98 = scmp.ne.s32.totalorder %s90, %s93
      %p99 = scmp.eq.s32.totalorder %s12, 0
      %p100 = por %p98, %p99
      %p101 = scmp.ne.s32.totalorder %s90, %s93
      %p102 = scmp.eq.s32.totalorder %s17, 1
      %p103 = por %p101, %p102
      %p104 = scmp.ne.s32.totalorder %s93, %s94
      %p105 = scmp.eq.s32.totalorder %s17, 0
      %p106 = por %p104, %p105
      %p107 = scmp.ne.s32.totalorder %s93, %s94
      %p108 = scmp.eq.s32.totalorder %s18, 1
      %p109 = por %p107, %p108
      %p111 = scmp.ne.s32.totalorder %s94, %s110
      %p112 = scmp.eq.s32.totalorder %s18, 0
      %p113 = por %p111, %p112
      %p114 = scmp.le.s32.totalorder 1, %s12
      %p115 = scmp.lt.s32.totalorder %s12, 3
      %p116 = pnand %p114, %p115
      %p117 = pneg %p116
      // Predicated region
      $region9: #{tpu_custom_call.1} parent=5 // pred_check
        _
      $region10: #{tpu_custom_call.1} parent=5 // pred_check_branch
        %119 = sbr.rel (%p116) target = $region12
      $region11: #{tpu_custom_call.1} parent=5 // pred_region
        %s120 = ssub.s32 %s12, 1
        // Predicated region
        $region13: #{tpu_custom_call.1} parent=11 // pred_check
          %p121 = pneg %p59
        $region14: #{tpu_custom_call.1} parent=11 // pred_check_branch
          %123 = sbr.rel (%p121) target = $region16
        $region15: #{tpu_custom_call.1} parent=11 // pred_region
          _
        $region16: #{tpu_custom_call.1} parent=11 // pred_fallthru
          _
        // Predicated region
        $region17: #{tpu_custom_call.1} parent=11 // pred_check
          %p124 = pneg %p80
        $region18: #{tpu_custom_call.1} parent=11 // pred_check_branch
          %126 = sbr.rel (%p124) target = $region20
        $region19: #{tpu_custom_call.1} parent=11 // pred_region
          _
        $region20: #{tpu_custom_call.1} parent=11 // pred_fallthru
          _
      $region12: #{tpu_custom_call.1} parent=5 // pred_fallthru
        _
      %p127 = scmp.lt.s32.totalorder %s12, 2
      // Predicated region
      $region21: #{tpu_custom_call.1} parent=5 // pred_check
        %p128 = pneg %p127
      $region22: #{tpu_custom_call.1} parent=5 // pred_check_branch
        %130 = sbr.rel (%p128) target = $region24
      $region23: #{tpu_custom_call.1} parent=5 // pred_region
        // Predicated region
        $region25: #{tpu_custom_call.1} parent=23 // pred_check
          %p131 = pneg %p32
        $region26: #{tpu_custom_call.1} parent=23 // pred_check_branch
          %133 = sbr.rel (%p131) target = $region28
        $region27: #{tpu_custom_call.1} parent=23 // pred_region
          %s134 = sand.u32 %s22, 1
          %s135 = scalar_lea.sflag [#allocation3], %s134
          %s136 = sand.u32 %s22, 1
          %s137 = smul.addr %s136, 8
          %s138 = scalar_lea.vmem [#allocation2], %s137
          %s140 = ssub.s32 128, 128
          %141 = vsyncadd %s135, %s140
          %s142 = smul.addr %s12, 2
          %s143 = smul.addr %s142, 64
          %s144 = scalar_lea.hbm %s0, %s143
          %s146 = sshll.u32 %s138, 4
          %s147 = int_to_ptr.vmem [resolvable:$true] %s146
          %149 = dma.hbm_to_vmem [thread:$0]  %s144, 128, %s147, %s135
        $region28: #{tpu_custom_call.1} parent=23 // pred_fallthru
          _
      $region24: #{tpu_custom_call.1} parent=5 // pred_fallthru
        _
      %p150 = scmp.le.s32.totalorder 1, %s12
      %p151 = scmp.lt.s32.totalorder %s12, 3
      %p152 = pnand %p150, %p151
      %p153 = pneg %p152
      // Predicated region
      $region29: #{tpu_custom_call.1} parent=5 // pred_check
        _
      $region30: #{tpu_custom_call.1} parent=5 // pred_check_branch
        %155 = sbr.rel (%p152) target = $region32
      $region31: #{tpu_custom_call.1} parent=5 // pred_region
        %s156 = ssub.s32 %s12, 1
        %s157 = sand.u32 %s25, 1
        %s158 = scalar_lea.sflag [#allocation3], %s157
        %s159 = sand.u32 %s25, 1
        %s160 = smul.addr %s159, 8
        %s161 = scalar_lea.vmem [#allocation2], %s160
        // Predicated region
        $region33: #{tpu_custom_call.1} parent=31 // pred_check
          %p162 = pneg %p38
        $region34: #{tpu_custom_call.1} parent=31 // pred_check_branch
          %164 = sbr.rel (%p162) target = $region36
        $region35: #{tpu_custom_call.1} parent=31 // pred_region
          %165 = dma.done %s158, 128
        $region36: #{tpu_custom_call.1} parent=31 // pred_fallthru
          _
        %s166 = sand.u32 %s25, 1
        %s167 = scalar_lea.sflag [#allocation3], %s166
        %s168 = sand.u32 %s25, 1
        %s169 = smul.addr %s168, 8
        %s170 = scalar_lea.vmem [#allocation2], %s169
        %p171 = pneg %p38
        %p172 = pneg %p35
        %p173 = pneg %p59
        %p174 = pneg %p56
        %p175 = pneg %p80
        %p176 = pneg %p77
        %p177 = pneg %p106
        %p178 = pneg %p103
        %p179 = scmp.lt.s32.totalorder %s17, 1
        %s180 = scalar_select %p179, %s17, 1
        %s181 = smul.addr %s180, 4
        %s182 = smul.addr %s181, 8
        %s183 = scalar_lea.vmem %s3, %s182
        %p184 = scmp.lt.s32.totalorder %s17, 1
        %s185 = scalar_select %p184, %s17, 1
        %s186 = smul.addr %s185, 4
        %s187 = smul.addr %s186, 8
        %s188 = scalar_lea.vmem %s3, %s187
        %v189 = vld [vmem:[%s161] sm:$0xff]
        %v190 = vlaneseq
        %v191 = vand.u32 %v190, 127
        %v192 = vadd.s32 %v191, 128
        %vm193 = vcmp.lt.s32.totalorder %v191, 0
        %v194 = vsub.s32 0, %v191
        %v195 = vsel %vm193, %v194, %v191
        %v196 = vshrl.u32 %v195, 4
        %v197 = vand.u32 %v195, 15
        %v198 = vsub.s32 0, %v197
        %v199 = vsel %vm193, %v198, %v197
        %vm200 = vcmp.lt.s32.totalorder %v192, 0
        %v201 = vsub.s32 0, %v192
        %v202 = vsel %vm200, %v201, %v192
        %v203 = vshrl.u32 %v202, 4
        %v204 = vand.u32 %v202, 15
        %v205 = vsub.s32 0, %v204
        %v206 = vsel %vm200, %v205, %v204
        %vm207 = vcmp.ne.s32.totalorder %v199, 0
        %vm208 = vcmp.ne.s32.totalorder %v206, 0
        %vm209 = vcmp.lt.s32.totalorder %v199, 0
        %vm210 = vcmp.lt.s32.totalorder %v206, 0
        %vm211 = vmand %vm209, %vm207
        %vm212 = vmand %vm210, %vm208
        %v213 = vadd.s32 %v199, 16
        %v214 = vadd.s32 %v206, 16
        %v215 = vsel %vm211, %v213, %v199
        %v216 = vsel %vm212, %v214, %v206
        %v218 = vcombine.high %v189, %v189
        %220 = vrot.lane.b32.xlu0 %v189, 17
        %v221 = vpop.permute.xlu0 %220
        %222 = vrot.lane.b32.xlu0 %v218, 17
        %v223 = vpop.permute.xlu0 %222
        %vm224 = vcmp.lt.s32.totalorder %v191, 17
        %v225 = vsel %vm224, %v221, %v223
        %v226 = vsel %vm224, %v223, %v221
        %vm227 = vcmp.ge.s32.totalorder %v191, 16
        %vm228 = vcmp.ge.s32.totalorder %v192, 16
        %vm229 = vcmp.ge.s32.totalorder %v215, 1
        %vm230 = vcmp.ge.s32.totalorder %v216, 1
        %vm231 = vmand %vm227, %vm229
        %vm232 = vmand %vm228, %vm230
        %v233 = vsel %vm231, %v226, 0.0
        %v234 = vsel %vm232, %v225, 0.0
        %235 = vrot.lane.b32.xlu0 %v189, 16
        %v236 = vpop.permute.xlu0 %235
        %237 = vrot.lane.b32.xlu0 %v218, 16
        %v238 = vpop.permute.xlu0 %237
        %vm239 = vcmp.lt.s32.totalorder %v191, 16
        %v240 = vsel %vm239, %v236, %v238
        %v241 = vsel %vm239, %v238, %v236
        %v242 = vsel %vm227, %v241, 0.0
        %v243 = vsel %vm228, %v240, 0.0
        %244 = vrot.lane.b32.xlu0 %v189, 15
        %v245 = vpop.permute.xlu0 %244
        %246 = vrot.lane.b32.xlu0 %v218, 15
        %v247 = vpop.permute.xlu0 %246
        %vm248 = vcmp.lt.s32.totalorder %v191, 15
        %v249 = vsel %vm248, %v245, %v247
        %v250 = vsel %vm248, %v247, %v245
        %vm251 = vcmp.le.s32.totalorder %v215, 14
        %vm252 = vcmp.le.s32.totalorder %v216, 14
        %vm253 = vmand %vm227, %vm251
        %vm254 = vmand %vm228, %vm252
        %v255 = vsel %vm253, %v250, 0.0
        %v256 = vsel %vm254, %v249, 0.0
        %257 = vrot.lane.b32.xlu0 %v189, 1
        %v258 = vpop.permute.xlu0 %257
        %259 = vrot.lane.b32.xlu0 %v218, 1
        %v260 = vpop.permute.xlu0 %259
        %vm261 = vcmp.lt.s32.totalorder %v191, 1
        %v262 = vsel %vm261, %v258, %v260
        %v263 = vsel %vm261, %v260, %v258
        %v264 = vsel %vm229, %v263, 0.0
        %v265 = vsel %vm230, %v262, 0.0
        %266 = vrot.lane.b32.xlu0 %v189, 127
        %v267 = vpop.permute.xlu0 %266
        %268 = vrot.lane.b32.xlu0 %v218, 127
        %v269 = vpop.permute.xlu0 %268
        %vm270 = vcmp.lt.s32.totalorder %v191, 127
        %v271 = vsel %vm270, %v267, %v269
        %v272 = vsel %vm270, %v269, %v267
        %v273 = vsel %vm251, %v271, 0.0
        %v274 = vsel %vm252, %v272, 0.0
        %275 = vrot.lane.b32.xlu0 %v189, 113
        %v276 = vpop.permute.xlu0 %275
        %277 = vrot.lane.b32.xlu0 %v218, 113
        %v278 = vpop.permute.xlu0 %277
        %vm279 = vcmp.lt.s32.totalorder %v191, 113
        %v280 = vsel %vm279, %v276, %v278
        %v281 = vsel %vm279, %v278, %v276
        %vm282 = vcmp.lt.s32.totalorder %v191, 240
        %vm283 = vcmp.lt.s32.totalorder %v192, 240
        %vm284 = vmand %vm282, %vm229
        %vm285 = vmand %vm283, %vm230
        %v286 = vsel %vm284, %v280, 0.0
        %v287 = vsel %vm285, %v281, 0.0
        %288 = vrot.lane.b32.xlu0 %v189, 112
        %v289 = vpop.permute.xlu0 %288
        %290 = vrot.lane.b32.xlu0 %v218, 112
        %v291 = vpop.permute.xlu0 %290
        %vm292 = vcmp.lt.s32.totalorder %v191, 112
        %v293 = vsel %vm292, %v289, %v291
        %v294 = vsel %vm292, %v291, %v289
        %v295 = vsel %vm282, %v293, 0.0
        %v296 = vsel %vm283, %v294, 0.0
        %297 = vrot.lane.b32.xlu0 %v189, 111
        %v298 = vpop.permute.xlu0 %297
        %299 = vrot.lane.b32.xlu0 %v218, 111
        %v300 = vpop.permute.xlu0 %299
        %vm301 = vcmp.lt.s32.totalorder %v191, 111
        %v302 = vsel %vm301, %v298, %v300
        %v303 = vsel %vm301, %v300, %v298
        %vm304 = vmand %vm282, %vm251
        %vm305 = vmand %vm283, %vm252
        %v306 = vsel %vm304, %v302, 0.0
        %v307 = vsel %vm305, %v303, 0.0
        %v310 = vrot.slane %v242, 4
        %v311 = vrot.slane %v243, 4
        %v316 = vrot.slane %v264, 4
        %v317 = vrot.slane %v265, 4
        %v322 = vrot.slane %v273, 4
        %v323 = vrot.slane %v274, 4
        %v328 = vrot.slane %v295, 4
        %v329 = vrot.slane %v296, 4
        %vm332 = vcmask 1043456
        %v333 = vsel %vm332, %v233, %v310
        %v334 = vsel %vm332, %v234, %v311
        %v335 = vsel %vm332, %v255, %v316
        %v336 = vsel %vm332, %v256, %v317
        %v337 = vsel %vm332, %v189, %v322
        %v338 = vsel %vm332, %v218, %v323
        %v339 = vsel %vm332, %v286, %v328
        %v340 = vsel %vm332, %v287, %v329
        %v341 = vld [vmem:[%s1] sm:$0xff]
        %v342 = vld [vmem:[%s2] sm:$0xff]
        %344 = vset.pattern.permute.xlu0 0
        %345 = vperm.xlu0 %344, %v342
        %v346 = vpop.permute.xlu0 %345
        %vm348 = vcmask 293888
        %v350 = vsel %vm348, %v341, 0
        %v353 = vsel %vm332, %v306, 0
        %v356 = vsel %vm332, %v307, 0
        %358 = vmatprep.subr.mxu0 0.0
        %359 = vmatpush1.msra.mxu0 0.0
        %360 = vmatprep.subr.mxu0 0.0
        %361 = vmatpush1.msra.mxu0 0.0
        %362 = vmatprep.subr.mxu0 0.0
        %363 = vmatpush1.msra.mxu0 0.0
        %364 = vmatprep.subr.mxu0 0.0
        %365 = vmatpush1.msra.mxu0 0.0
        %366 = vmatprep.subr.mxu0 0.0
        %367 = vmatpush1.msra.mxu0 0.0
        %368 = vmatprep.subr.mxu0 0.0
        %369 = vmatpush1.msra.mxu0 0.0
        %370 = vmatprep.subr.mxu0 0.0
        %371 = vmatpush1.msra.mxu0 0.0
        %372 = vmatprep.subr.mxu0 0.0
        %373 = vmatpush1.msra.mxu0 0.0
        %374 = vmatprep.subr.mxu0 0.0
        %375 = vmatpush1.msra.mxu0 0.0
        %376 = vmatprep.subr.mxu0 0.0
        %377 = vmatpush1.msra.mxu0 0.0
        %378 = vmatprep.subr.mxu0 0.0
        %379 = vmatpush1.msra.mxu0 0.0
        %380 = vmatprep.subr.mxu0 %v356
        %381 = vmatpush1.msra.mxu0 %v353
        %382 = vmatprep.subr.mxu0 %v340
        %383 = vmatpush1.msra.mxu0 %v339
        %384 = vmatprep.subr.mxu0 %v338
        %385 = vmatpush1.msra.mxu0 %v337
        %386 = vmatprep.subr.mxu0 %v336
        %387 = vmatpush1.msra.mxu0 %v335
        %388 = vmatprep.subr.mxu0 %v334
        %389 = vmatpush1.msra.mxu0 %v333
        %390 = vmatprep.subr.mxu0 0.0
        %391 = vmatpush2.msra.mxu0 0.0
        %392 = vmatprep.subr.mxu0 0.0
        %393 = vmatpush2.msra.mxu0 0.0
        %394 = vmatprep.subr.mxu0 0.0
        %395 = vmatpush2.msra.mxu0 0.0
        %396 = vmatprep.subr.mxu0 0.0
        %397 = vmatpush2.msra.mxu0 0.0
        %398 = vmatprep.subr.mxu0 0.0
        %399 = vmatpush2.msra.mxu0 0.0
        %400 = vmatprep.subr.mxu0 0.0
        %401 = vmatpush2.msra.mxu0 0.0
        %402 = vmatprep.subr.mxu0 0.0
        %403 = vmatpush2.msra.mxu0 0.0
        %404 = vmatprep.subr.mxu0 0.0
        %405 = vmatpush2.msra.mxu0 0.0
        %406 = vmatprep.subr.mxu0 0.0
        %407 = vmatpush2.msra.mxu0 0.0
        %408 = vmatprep.subr.mxu0 0.0
        %409 = vmatpush2.msra.mxu0 0.0
        %410 = vmatprep.subr.mxu0 0.0
        %411 = vmatpush2.msra.mxu0 0.0
        %412 = vmatprep.subr.mxu0 0.0
        %413 = vmatpush2.msra.mxu0 0.0
        %414 = vmatprep.subr.mxu0 0.0
        %415 = vmatpush2.msra.mxu0 0.0
        %416 = vmatprep.subr.mxu0 0.0
        %417 = vmatpush2.msra.mxu0 0.0
        %418 = vmatprep.subr.mxu0 0.0
        %419 = vmatpush2.msra.mxu0 0.0
        %420 = vmatprep.subr.mxu0 0.0
        %421 = vmatpush2.msra.mxu0 0.0
        %422 = vmatprep.mubr.f32.mxu0 0.0
        %423 = vmatmul.mubr.f32.gmra.mxu0 %v350
        %v424 = vpop.f32.mrf.mxu0
        %v425 = vadd.f32 %v346, %v424
        %v426 = vpop.f32.mrf.mxu0
        %v427 = vadd.f32 %v346, %v426
        %428 = vdwg.mxu0
        %v429 = vmax.f32 %v425, 0.0
        %v430 = vmax.f32 %v427, 0.0
        %431 = vst [vmem:[%s188] sm:$0xf] %v189
        %432 = vst [vmem:[%s188 + $0x8] sm:$0xf] %v218
        %v435 = vrot.slane %v429, 4
        %v436 = vrot.slane %v430, 4
        %439 = vst [vmem:[%s188] sm:$0xf0] %v435
        %440 = vst [vmem:[%s188 + $0x8] sm:$0xf0] %v436
        %441 = vst [vmem:[%s188 + $0x10] sm:$0xf] %v435
        %442 = vst [vmem:[%s188 + $0x18] sm:$0xf] %v436
        %p443 = scmp.lt.s32.totalorder %s17, 1
        %s444 = scalar_select %p443, %s17, 1
        %s445 = smul.addr %s444, 4
        %s446 = smul.addr %s445, 8
        %s447 = scalar_lea.vmem %s3, %s446
        // Predicated region
        $region37: #{tpu_custom_call.1} parent=31 // pred_check
          %p448 = pneg %p103
        $region38: #{tpu_custom_call.1} parent=31 // pred_check_branch
          %450 = sbr.rel (%p448) target = $region40
        $region39: #{tpu_custom_call.1} parent=31 // pred_region
          _
        $region40: #{tpu_custom_call.1} parent=31 // pred_fallthru
          _
      $region32: #{tpu_custom_call.1} parent=5 // pred_fallthru
        _
      %p451 = scmp.le.s32.totalorder 2, %s12
      // Predicated region
      $region41: #{tpu_custom_call.1} parent=5 // pred_check
        %p452 = pneg %p451
      $region42: #{tpu_custom_call.1} parent=5 // pred_check_branch
        %454 = sbr.rel (%p452) target = $region44
      $region43: #{tpu_custom_call.1} parent=5 // pred_region
        %s455 = ssub.s32 %s12, 2
        // Predicated region
        $region45: #{tpu_custom_call.1} parent=43 // pred_check
          %p456 = pneg %p109
        $region46: #{tpu_custom_call.1} parent=43 // pred_check_branch
          %458 = sbr.rel (%p456) target = $region48
        $region47: #{tpu_custom_call.1} parent=43 // pred_region
          %p459 = scmp.lt.s32.totalorder %s18, 1
          %s460 = scalar_select %p459, %s18, 1
          %s461 = smul.addr %s460, 4
          %s462 = smul.addr %s461, 8
          %s463 = scalar_lea.vmem %s3, %s462
        $region48: #{tpu_custom_call.1} parent=43 // pred_fallthru
          _
      $region44: #{tpu_custom_call.1} parent=5 // pred_fallthru
        _
    $region6: #{tpu_custom_call.1} parent=1 // loop_footer
      %s16 = sadd.s32 1, %s12
    $region7: #{tpu_custom_call.1} parent=1 // loop_footer_branch
      %11 = sbr.rel target = $region3
    $region8: #{tpu_custom_call.1} parent=1 // loop_exit
      _
    %464 = vsyncpa [#allocation3], 1
    %s465 = scalar_lea.sflag [#allocation3], 1
    %466 = vsyncpa %s465, 1

</llo_original>
